<compile_context>
chip_gen: v6e
topology: v6e:2x2x1
jax: 0.10.0
libtpu: 0.0.40
codegen_flags: <defaults>
</compile_context>

<pallas_src>
import functools

import jax
import jax.numpy as jnp
from jax.experimental import pallas as pl
from jax.experimental.pallas import tpu as pltpu


def _round_up(x: int, m: int) -> int:
    return ((x + m - 1) // m) * m


def _residual_linear_kernel(x_ref, wt_ref, b_ref, *rest,
                            apply_dropout: bool,
                            keep_threshold: int,
                            keep_scale: float):
    if apply_dropout:
        bits_ref, o_ref = rest
    else:
        (o_ref,) = rest

    x = x_ref[...]                                     # (tm, Dp) f32
    # ReLU on the VPU, then cast to the MXU compute dtype (bf16).
    h = jnp.maximum(x, 0.0).astype(wt_ref.dtype)
    # MXU matmul with f32 accumulate.
    y = jnp.dot(h, wt_ref[...], preferred_element_type=jnp.float32)
    y = y + b_ref[...]                                 # bias broadcast over rows (f32)
    out = x + y                                        # residual add in f32

    if apply_dropout:
        # PyTorch train-mode dropout: drop with prob p, scale kept by 1/(1-p).
        # Integer threshold compare on raw uint32 bits (no int->float convert).
        keep = bits_ref[...] >= jnp.uint32(keep_threshold)
        out = jnp.where(keep, out * jnp.float32(keep_scale), 0.0)

    o_ref[...] = out.astype(o_ref.dtype)


def prepare_params(weight, bias, *, compute_dtype=jnp.bfloat16):
    """One-time parameter prep (outside the hot path): transpose torch (out,in) to
    (in,out), zero-pad features up to a multiple of 128 lanes, cast W^T to the MXU
    compute dtype.  Bias stays f32."""
    d_out, d_in = weight.shape
    assert d_out == d_in, "ResidualLinear is square (d_hidden -> d_hidden)"
    dp = _round_up(d_in, 128)
    wt = jnp.zeros((dp, dp), dtype=compute_dtype)
    wt = wt.at[:d_in, :d_out].set(weight.T.astype(compute_dtype))
    b = jnp.zeros((1, dp), dtype=jnp.float32)
    b = b.at[0, :d_out].set(bias.astype(jnp.float32))
    return wt, b


def residual_linear(x, wt_padded, bias_padded, *, p_dropout: float,
                    training: bool = False, rng=None, tm: int = 256):
    """x: (..., D).  wt_padded / bias_padded come from prepare_params()."""
    orig_shape = x.shape
    d = orig_shape[-1]
    dp = wt_padded.shape[0]

    x2 = x.reshape(-1, d).astype(jnp.float32)
    m = x2.shape[0]

    # Row tile: MXU-friendly by default, clamped (multiple of 8 sublanes) for tiny
    # inputs; M is rounded up so any batch*seq size works (padded rows are zero).
    tm_eff = min(tm, _round_up(m, 8))
    mp = _round_up(m, tm_eff)

    if mp != m or dp != d:
        x2 = jnp.pad(x2, ((0, mp - m), (0, dp - d)))

    apply_dropout = bool(training) and float(p_dropout) > 0.0
    keep_threshold = min(int(round(float(p_dropout) * 2.0 ** 32)), 2 ** 32 - 1)
    keep_scale = 1.0 / (1.0 - float(p_dropout)) if apply_dropout else 1.0

    grid = (mp // tm_eff,)

    in_specs = [
        pl.BlockSpec((tm_eff, dp), lambda i: (i, 0)),   # x row tile
        # Resident weight / bias (constant index_map -> fetched once, reused).
        # TODO(synk): for large d_hidden (f32 D >~ 2048) add K-tiling with an f32
        # scratch accumulator + pl.when init/writeback, and single-buffer the
        # weight (pipeline_mode=pl.Buffered(1)) so it fits v7x's 64 MiB VMEM.
        pl.BlockSpec((dp, dp), lambda i: (0, 0)),
        pl.BlockSpec((1, dp), lambda i: (0, 0)),
    ]
    inputs = [x2, wt_padded, bias_padded]

    if apply_dropout:
        if rng is None:
            rng = jax.random.PRNGKey(0)
        bits = jax.random.bits(rng, (mp, dp), dtype=jnp.uint32)
        in_specs.append(pl.BlockSpec((tm_eff, dp), lambda i: (i, 0)))
        inputs.append(bits)

    # VMEM budget: double-buffered x / out (+ dropout bits) tiles + resident params.
    itemsize_w = jnp.dtype(wt_padded.dtype).itemsize
    vmem_needed = (2 * tm_eff * dp * 4                        # x tiles (f32)
                   + 2 * tm_eff * dp * 4                      # out tiles (f32)
                   + (2 * tm_eff * dp * 4 if apply_dropout else 0)
                   + 2 * dp * dp * itemsize_w                 # weight buffers (bf16)
                   + 2 * dp * 4)                              # bias
    vmem_limit = min(max(2 * vmem_needed, 32 * 1024 * 1024), 64 * 1024 * 1024)

    kernel = functools.partial(
        _residual_linear_kernel,
        apply_dropout=apply_dropout,
        keep_threshold=keep_threshold,
        keep_scale=keep_scale,
    )

    out = pl.pallas_call(
        kernel,
        out_shape=jax.ShapeDtypeStruct((mp, dp), x.dtype),
        grid_spec=pltpu.PrefetchScalarGridSpec(
            num_scalar_prefetch=0,
            grid=grid,
            in_specs=in_specs,
            out_specs=pl.BlockSpec((tm_eff, dp), lambda i: (i, 0)),
        ),
        compiler_params=pltpu.CompilerParams(
            dimension_semantics=("parallel",),   # no cross-step state -> megacore OK
            vmem_limit_bytes=vmem_limit,
        ),
    )(*inputs)

    return out[:m, :d].reshape(orig_shape)


if __name__ == "__main__":
    # Small shapes implied by the module: batch=2, seq=8, d_hidden=32
    B, S, D = 2, 8, 32
    P_DROPOUT = 0.1

    key = jax.random.PRNGKey(0)
    kx, kw, kb = jax.random.split(key, 3)

    x = jax.random.normal(kx, (B, S, D), dtype=jnp.float32)

    # Deterministic param init mimicking torch.nn.Linear default (uniform +-1/sqrt(D)).
    bound = 1.0 / (D ** 0.5)
    weight = jax.random.uniform(kw, (D, D), minval=-bound, maxval=bound, dtype=jnp.float32)
    bias = jax.random.uniform(kb, (D,), minval=-bound, maxval=bound, dtype=jnp.float32)

    # One-time parameter prep (transpose + lane-pad + bf16 cast), outside the hot path.
    wt_p, b_p = prepare_params(weight, bias)

    # Reference using the same bf16 matmul operands / f32 accumulate as the kernel.
    h_ref = jnp.maximum(x, 0.0).reshape(-1, D).astype(jnp.bfloat16)
    ref = (x.reshape(-1, D)
           + jnp.dot(h_ref, weight.T.astype(jnp.bfloat16),
                     preferred_element_type=jnp.float32)
           + bias).reshape(B, S, D)

    # Eval mode (dropout = identity): deterministic check against the reference.
    out_eval = residual_linear(x, wt_p, b_p, p_dropout=P_DROPOUT, training=False)
    out_eval = jax.block_until_ready(out_eval)
    assert out_eval.shape == x.shape
    assert jnp.allclose(out_eval, ref, atol=1e-2, rtol=1e-2), "eval-mode mismatch vs reference"

    # Training mode: exercises the in-kernel threshold mask + 1/(1-p) scaling.
    out_train = residual_linear(x, wt_p, b_p, p_dropout=P_DROPOUT, training=True,
                                rng=jax.random.PRNGKey(123))
    out_train = jax.block_until_ready(out_train)
    assert out_train.shape == x.shape
    assert bool(jnp.all(jnp.isfinite(out_train)))
    kept = out_train != 0.0
    n_kept = int(jnp.sum(kept))
    assert 0 < n_kept < out_train.size, "dropout mask degenerate"
    # kept positions equal ref / (1-p); dropped positions are exactly zero.
    assert jnp.allclose(jnp.where(kept, out_train, 0.0),
                        jnp.where(kept, ref / (1.0 - P_DROPOUT), 0.0),
                        atol=1e-2, rtol=1e-2)

    print("KERNEL_OK")
</pallas_src>

<mosaic_0001>
module attributes {stable_mosaic.version = 11 : i64} {
  func.func @_residual_linear_kernel(%arg0: i32, %arg1: memref<16x128xf32, #tpu.memory_space<vmem>>, %arg2: memref<128x128xbf16, #tpu.memory_space<vmem>>, %arg3: memref<1x128xf32, #tpu.memory_space<vmem>>, %arg4: memref<16x128xf32, #tpu.memory_space<vmem>>) attributes {dimension_semantics = [#tpu.dimension_semantics<parallel>], iteration_bounds = array<i64: 1>, scalar_prefetch = 0 : i64, scratch_operands = 0 : i64, tpu.core_type = #tpu.core_type<tc>, window_params = [{transform_indices = @transform_0, window_bounds = array<i64: 16, 128>}, {pipeline_mode = #tpu.pipeline_mode<synchronous>, transform_indices = @transform_1, window_bounds = array<i64: 128, 128>}, {pipeline_mode = #tpu.pipeline_mode<synchronous>, transform_indices = @transform_2, window_bounds = array<i64: 1, 128>}, {transform_indices = @transform_3, window_bounds = array<i64: 16, 128>}]} {
    %c0 = arith.constant 0 : index
    %c0_0 = arith.constant 0 : index
    %0 = vector.load %arg1[%c0, %c0_0] : memref<16x128xf32, #tpu.memory_space<vmem>>, vector<16x128xf32>
    %cst = arith.constant 0.000000e+00 : f32
    %1 = vector.broadcast %cst : f32 to vector<16x128xf32>
    %2 = arith.maximumf %0, %1 : vector<16x128xf32>
    %3 = arith.truncf %2 : vector<16x128xf32> to vector<16x128xbf16>
    %c0_1 = arith.constant 0 : index
    %c0_2 = arith.constant 0 : index
    %4 = vector.load %arg2[%c0_1, %c0_2] : memref<128x128xbf16, #tpu.memory_space<vmem>>, vector<128x128xbf16>
    %cst_3 = arith.constant dense<0.000000e+00> : vector<16x128xf32>
    %5 = tpu.matmul %3, %4, %cst_3 {dimension_numbers = #tpu.dot_dimension_numbers<[1], [0], [0], [1], [0, 0, 1, 1], [], []>} : vector<16x128xbf16>, vector<128x128xbf16>, vector<16x128xf32> -> vector<16x128xf32>
    %c0_4 = arith.constant 0 : index
    %c0_5 = arith.constant 0 : index
    %6 = vector.load %arg3[%c0_4, %c0_5] : memref<1x128xf32, #tpu.memory_space<vmem>>, vector<1x128xf32>
    %7 = vector.broadcast %6 : vector<1x128xf32> to vector<16x128xf32>
    %8 = arith.addf %5, %7 : vector<16x128xf32>
    %9 = arith.addf %0, %8 : vector<16x128xf32>
    %c0_6 = arith.constant 0 : index
    %c0_7 = arith.constant 0 : index
    %10 = vector.load %arg4[%c0_6, %c0_7] : memref<16x128xf32, #tpu.memory_space<vmem>>, vector<16x128xf32>
    tpu.vector_store %arg4[%c0_6, %c0_7], %9 {strides = array<i32>} : memref<16x128xf32, #tpu.memory_space<vmem>>, vector<16x128xf32>,
    return
  }
  func.func @transform_0(%arg0: i32) -> (i32, i32) {
    %c0_i32 = arith.constant 0 : i32
    %c0_i32_0 = arith.constant 0 : i32
    return %arg0, %c0_i32 : i32, i32
  }
  func.func @transform_1(%arg0: i32) -> (i32, i32) {
    %c0_i32 = arith.constant 0 : i32
    %c0_i32_0 = arith.constant 0 : i32
    %c0_i32_1 = arith.constant 0 : i32
    return %c0_i32, %c0_i32_0 : i32, i32
  }
  func.func @transform_2(%arg0: i32) -> (i32, i32) {
    %c0_i32 = arith.constant 0 : i32
    %c0_i32_0 = arith.constant 0 : i32
    %c0_i32_1 = arith.constant 0 : i32
    return %c0_i32, %c0_i32_0 : i32, i32
  }
  func.func @transform_3(%arg0: i32) -> (i32, i32) {
    %c0_i32 = arith.constant 0 : i32
    %c0_i32_0 = arith.constant 0 : i32
    return %arg0, %c0_i32 : i32, i32
  }
}

</mosaic_0001>

<llo_original>
// kernel: tpu_custom_call.1
$region0: #{tpu_custom_call.1}
  #allocation0 [shape = 'u32[]', space=smem, size = 0x4, offset = 0x4, fixed_abs, tag = 'smem constant byte address 0x4 - core index']
  #allocation1 [shape = 'u32[144,128]{1,0:T(1,128)}', space=vmem, size = 0x12000, scoped, tag = 'internal scratch']
  %s0 = inlined_call_operand.hbm [shape: f32[16,128], index: 0, kind: input, shape index: {}]
  %s1 = inlined_call_operand.hbm [shape: bf16[128,128], index: 1, kind: input, shape index: {}]
  %s2 = inlined_call_operand.vmem [shape: f32[1,128], index: 2, kind: input, shape index: {}]
  %s3 = inlined_call_operand.hbm [shape: f32[16,128], index: 3, kind: output, shape index: {}]
  %s4 = sld [smem:[#allocation0]]
  $region30: #{tpu_custom_call.1} parent=0
    _
  %s6 = ssub.s32 1, %s4
  %s7 = scalar_select 0, %s6, %s4
  $region1: #{tpu_custom_call.1} parent=0
    #allocation2 [shape = 'u8[8192]{0}', space=vmem, size = 0x2000, scoped, tag = 'input window, operand 0, single buffered']
    #allocation3 [shape = 's32[1]{0}', space=sflag, size = 0x4, scoped, tag = 'scoped memory for tpu_custom_call.1']
    #allocation4 [shape = 's32[1]{0}', space=sflag, size = 0x4, scoped, tag = 'scoped memory for tpu_custom_call.1']
    #allocation5 [shape = 'u8[32768]{0}', space=vmem, size = 0x8000, scoped, tag = 'input window, operand 1, single buffered']
    #allocation6 [shape = 's32[1]{0}', space=sflag, size = 0x4, scoped, tag = 'scoped memory for tpu_custom_call.1']
    #allocation7 [shape = 'u8[8192]{0}', space=vmem, size = 0x2000, scoped, tag = 'output window, operand 0, single buffered']
    %8 = vsyncpa [#allocation3], 0
    %9 = vsyncpa [#allocation6], 0
    %10 = vsyncpa [#allocation4], 0
    // Predicated region
    $region2: #{tpu_custom_call.1} parent=1 // pred_check
      _
    $region3: #{tpu_custom_call.1} parent=1 // pred_check_branch
      %12 = sbr.rel (0) target = $region5
    $region4: #{tpu_custom_call.1} parent=1 // pred_region
      %s14 = ssub.s32 256, 256
      %15 = vsyncadd [#allocation3], %s14
      %s16 = sshll.u32 [#allocation2], 4
      %s17 = int_to_ptr.vmem [resolvable:$true] %s16
      %22 = dma.hbm_to_vmem [thread:$0]  %s0, 256, %s17, [#allocation3], 128, 128, 8
    $region5: #{tpu_custom_call.1} parent=1 // pred_fallthru
      _
    // Predicated region
    $region6: #{tpu_custom_call.1} parent=1 // pred_check
      _
    $region7: #{tpu_custom_call.1} parent=1 // pred_check_branch
      %24 = sbr.rel (0) target = $region9
    $region8: #{tpu_custom_call.1} parent=1 // pred_region
      %s26 = ssub.s32 1024, 1024
      %27 = vsyncadd [#allocation6], %s26
      %s28 = sshll.u32 [#allocation5], 4
      %s29 = int_to_ptr.vmem [resolvable:$true] %s28
      %34 = dma.hbm_to_vmem [thread:$0]  %s1, 1024, %s29, [#allocation6], 64, 64, 4
    $region9: #{tpu_custom_call.1} parent=1 // pred_fallthru
      _
    // Predicated region
    $region10: #{tpu_custom_call.1} parent=1 // pred_check
      _
    $region11: #{tpu_custom_call.1} parent=1 // pred_check_branch
      %36 = sbr.rel (0) target = $region13
    $region12: #{tpu_custom_call.1} parent=1 // pred_region
      _
    $region13: #{tpu_custom_call.1} parent=1 // pred_fallthru
      _
    // Predicated region
    $region14: #{tpu_custom_call.1} parent=1 // pred_check
      _
    $region15: #{tpu_custom_call.1} parent=1 // pred_check_branch
      %38 = sbr.rel (0) target = $region17
    $region16: #{tpu_custom_call.1} parent=1 // pred_region
      %39 = dma.done [#allocation3], 256
    $region17: #{tpu_custom_call.1} parent=1 // pred_fallthru
      _
    // Predicated region
    $region18: #{tpu_custom_call.1} parent=1 // pred_check
      _
    $region19: #{tpu_custom_call.1} parent=1 // pred_check_branch
      %41 = sbr.rel (0) target = $region21
    $region20: #{tpu_custom_call.1} parent=1 // pred_region
      %42 = dma.done [#allocation6], 1024
    $region21: #{tpu_custom_call.1} parent=1 // pred_fallthru
      _
    %v44 = vld [vmem:[#allocation2] sm:$0xff]
    %v45 = vld [vmem:[#allocation2 + $0x8] sm:$0xff]
    %v46 = vmax.f32 %v44, 0.0
    %v47 = vmax.f32 %v45, 0.0
    %v48 = vpack.c.bf16 %v47, %v46
    %v49 = vld [vmem:[#allocation5] sm:$0xf]
    %v50 = vld [vmem:[#allocation5 + $0x4] sm:$0xf]
    %v51 = vld [vmem:[#allocation5 + $0x8] sm:$0xf]
    %v52 = vld [vmem:[#allocation5 + $0xc] sm:$0xf]
    %v53 = vld [vmem:[#allocation5 + $0x10] sm:$0xf]
    %v54 = vld [vmem:[#allocation5 + $0x14] sm:$0xf]
    %v55 = vld [vmem:[#allocation5 + $0x18] sm:$0xf]
    %v56 = vld [vmem:[#allocation5 + $0x1c] sm:$0xf]
    %v57 = vld [vmem:[#allocation5 + $0x20] sm:$0xf]
    %v58 = vld [vmem:[#allocation5 + $0x24] sm:$0xf]
    %v59 = vld [vmem:[#allocation5 + $0x28] sm:$0xf]
    %v60 = vld [vmem:[#allocation5 + $0x2c] sm:$0xf]
    %v61 = vld [vmem:[#allocation5 + $0x30] sm:$0xf]
    %v62 = vld [vmem:[#allocation5 + $0x34] sm:$0xf]
    %v63 = vld [vmem:[#allocation5 + $0x38] sm:$0xf]
    %v64 = vld [vmem:[#allocation5 + $0x3c] sm:$0xf]
    %v65 = vld [vmem:[%s2] sm:$0x1]
    %v67 = vlaneseq
    %v68 = vshrl.u32 %v67, 7
    %v69 = vsub.s32 0, %v68
    %v70 = vrot.slane %v65, %v69
    %v88 = vunpack.c.l.b16 %v49
    %v89 = vunpack.c.l.b16 %v50
    %v90 = vunpack.c.l.b16 %v51
    %v91 = vunpack.c.l.b16 %v52
    %v92 = vunpack.c.l.b16 %v53
    %v93 = vunpack.c.l.b16 %v54
    %v94 = vunpack.c.l.b16 %v55
    %v95 = vunpack.c.l.b16 %v56
    %v96 = vunpack.c.l.b16 %v57
    %v97 = vunpack.c.l.b16 %v58
    %v98 = vunpack.c.l.b16 %v59
    %v99 = vunpack.c.l.b16 %v60
    %v100 = vunpack.c.l.b16 %v61
    %v101 = vunpack.c.l.b16 %v62
    %v102 = vunpack.c.l.b16 %v63
    %v103 = vunpack.c.l.b16 %v64
    %v104 = vpack.c.b16 %v89, %v88
    %v105 = vpack.c.b16 %v91, %v90
    %v106 = vpack.c.b16 %v93, %v92
    %v107 = vpack.c.b16 %v95, %v94
    %v108 = vpack.c.b16 %v97, %v96
    %v109 = vpack.c.b16 %v99, %v98
    %v110 = vpack.c.b16 %v101, %v100
    %v111 = vpack.c.b16 %v103, %v102
    %120 = vmatprep.subr.bf16.mxu0 0
    %121 = vmatpush1.bf16.msra.mxu0 %v111
    %122 = vmatprep.subr.bf16.mxu0 0
    %123 = vmatpush1.bf16.msra.mxu0 %v110
    %124 = vmatprep.subr.bf16.mxu0 0
    %125 = vmatpush1.bf16.msra.mxu0 %v109
    %126 = vmatprep.subr.bf16.mxu0 0
    %127 = vmatpush1.bf16.msra.mxu0 %v108
    %128 = vmatprep.subr.bf16.mxu0 0
    %129 = vmatpush1.bf16.msra.mxu0 %v107
    %130 = vmatprep.subr.bf16.mxu0 0
    %131 = vmatpush1.bf16.msra.mxu0 %v106
    %132 = vmatprep.subr.bf16.mxu0 0
    %133 = vmatpush1.bf16.msra.mxu0 %v105
    %134 = vmatprep.subr.bf16.mxu0 0
    %135 = vmatpush1.bf16.msra.mxu0 %v104
    %136 = vmatprep.subr.bf16.mxu0 0
    %137 = vmatpush2.bf16.msra.mxu0 0
    %138 = vmatprep.subr.bf16.mxu0 0
    %139 = vmatpush2.bf16.msra.mxu0 0
    %140 = vmatprep.subr.bf16.mxu0 0
    %141 = vmatpush2.bf16.msra.mxu0 0
    %142 = vmatprep.subr.bf16.mxu0 0
    %143 = vmatpush2.bf16.msra.mxu0 0
    %144 = vmatprep.subr.bf16.mxu0 0
    %145 = vmatpush2.bf16.msra.mxu0 0
    %146 = vmatprep.subr.bf16.mxu0 0
    %147 = vmatpush2.bf16.msra.mxu0 0
    %148 = vmatprep.subr.bf16.mxu0 0
    %149 = vmatpush2.bf16.msra.mxu0 0
    %150 = vmatprep.subr.bf16.mxu0 0
    %151 = vmatpush2.bf16.msra.mxu0 0
    %152 = vmatprep.mubr.bf16.mxu0 0
    %153 = vmatmul.mubr.bf16.gmra.mxu0 %v48
    %v154 = vpop.f32.mrf.mxu0
    %v155 = vadd.f32 %v70, %v154
    %v156 = vpop.f32.mrf.mxu0
    %v157 = vpop.f32.mrf.mxu0
    %v158 = vadd.f32 %v70, %v157
    %v159 = vpop.f32.mrf.mxu0
    %160 = vdwg.mxu0
    %v161 = vadd.f32 %v44, %v155
    %v162 = vadd.f32 %v45, %v158
    %163 = vst [vmem:[#allocation7] sm:$0xff] %v161
    %164 = vst [vmem:[#allocation7 + $0x8] sm:$0xff] %v162
    // Predicated region
    $region22: #{tpu_custom_call.1} parent=1 // pred_check
      _
    $region23: #{tpu_custom_call.1} parent=1 // pred_check_branch
      %166 = sbr.rel (0) target = $region25
    $region24: #{tpu_custom_call.1} parent=1 // pred_region
      %s168 = ssub.s32 256, 256
      %169 = vsyncadd [#allocation4], %s168
      %s170 = sshll.u32 [#allocation7], 4
      %s171 = int_to_ptr.vmem [resolvable:$true] %s170
      %176 = dma.vmem_to_hbm [thread:$0]  %s171, 256, %s3, [#allocation4], 128, 128, 8
    $region25: #{tpu_custom_call.1} parent=1 // pred_fallthru
      _
    // Predicated region
    $region26: #{tpu_custom_call.1} parent=1 // pred_check
      _
    $region27: #{tpu_custom_call.1} parent=1 // pred_check_branch
      %178 = sbr.rel (0) target = $region29
    $region28: #{tpu_custom_call.1} parent=1 // pred_region
      %179 = dma.done [#allocation4], 256
    $region29: #{tpu_custom_call.1} parent=1 // pred_fallthru
      _
    %180 = vsyncpa [#allocation3], 1
    %181 = vsyncpa [#allocation6], 1
    %182 = vsyncpa [#allocation4], 1

</llo_original>
